<compile_context>
chip_gen: v7x
topology: tpu7x:2x2x1
jax: 0.10.0
libtpu: 0.0.40
codegen_flags: <defaults>
</compile_context>

<pallas_src>
import functools

import jax
import jax.numpy as jnp
from jax.experimental import pallas as pl
from jax.experimental.pallas import tpu as pltpu


def _round_up(n, m):
    return ((n + m - 1) // m) * m


# ----------------------------------------------------------------------------
# Pallas kernel: one batch tile of the whole forward pass.
#   x_ref    [TB, D]        input rows (f32, cast to bf16 for the MXU)
#   eps_ref  [TB, 2L]       reparam noise, [eps1 | eps2] (f32)
#   w1_ref   [D, 128]       fc1 weight (bf16)
#   s128_ref [128, 256]     [:, 0:64]  fc2 W | [:, 128:128+D] fc7 W      (bf16)
#   s64_ref  [64, 384]      [:, 0:4L]  fused mu|lv W | [:, 128:128+2L] attn1 W
#                           | [:, 256:384] fc6 W                         (bf16)
#   s2l_ref  [2L, 256]      [:, 0:64]  attn0 W | [:, 128:224] fused aux0|fc5 W (bf16)
#   vec_ref  [1, 10*128]    biases + aux1 weight row, each at a 128-aligned
#                           lane offset (f32)
# Output:
#   out_ref  [TB, D+4L+1]   [recon | mu1 mu2 lv1 lv2 | sigmoid(aux)]
# ----------------------------------------------------------------------------
def _hic_vae_kernel(x_ref, eps_ref, w1_ref, s128_ref, s64_ref, s2l_ref, vec_ref,
                    out_ref):
    f32 = jnp.float32
    bf16 = jnp.bfloat16
    D = x_ref.shape[1]
    L2 = eps_ref.shape[1]          # 2 * latent_dim
    L4 = 2 * L2

    def seg(i, width):             # 128-aligned lane segment of the vector slab
        return vec_ref[:, 128 * i: 128 * i + width]

    b1 = seg(0, 128)
    b2 = seg(1, 64)
    bmulv = seg(2, L4)
    ba0 = seg(3, 64)
    ba1 = seg(4, L2)
    b_af = seg(5, 96)              # [aux0 bias (32) | fc5 bias (64)]
    bx1 = seg(6, 1)
    b6 = seg(7, 128)
    b7 = seg(8, D)
    wx1_row = seg(9, 32)           # aux_network[2] weight as a [1, 32] row

    x = x_ref[...].astype(bf16)
    eps = eps_ref[...]             # stays f32 (elementwise only)

    # ---- encoder (bf16 MXU operands, f32 accumulation + bias/activation) ----
    h = jnp.maximum(jnp.dot(x, w1_ref[...], preferred_element_type=f32) + b1, 0.0)
    h = jnp.maximum(
        jnp.dot(h.astype(bf16), s128_ref[:, 0:64], preferred_element_type=f32) + b2,
        0.0)

    # fused mu|logvar heads: single [64, 4L] matmul, columns = [mu1 mu2 | lv1 lv2]
    mulv = jnp.dot(h.astype(bf16), s64_ref[:, 0:L4],
                   preferred_element_type=f32) + bmulv
    mu = mulv[:, 0:L2]
    lv = mulv[:, L2:L4]

    # reparameterize (z = cat([z1, z2], 1) via concatenated heads / noise)
    z = mu + eps * jnp.exp(0.5 * lv)

    # ---- attention gate ----
    a = jnp.maximum(
        jnp.dot(z.astype(bf16), s2l_ref[:, 0:64], preferred_element_type=f32) + ba0,
        0.0)
    gate = jax.nn.sigmoid(
        jnp.dot(a.astype(bf16), s64_ref[:, 128:128 + L2],
                preferred_element_type=f32) + ba1)
    zg = z * gate
    zgb = zg.astype(bf16)

    # ---- fused aux0 (2L->32) | fc5 (2L->64): one dot on the shared LHS ----
    ud = jnp.maximum(
        jnp.dot(zgb, s2l_ref[:, 128:224], preferred_element_type=f32) + b_af, 0.0)
    u = ud[:, 0:32]
    d = ud[:, 32:96]

    # aux 32 -> 1 as a VPU/XLU row reduction (no 1-lane MXU pass), then sigmoid
    sig_u = jax.nn.sigmoid(jnp.sum(u * wx1_row, axis=-1, keepdims=True) + bx1)

    # ---- decoder ----
    d = jnp.maximum(
        jnp.dot(d.astype(bf16), s64_ref[:, 256:384], preferred_element_type=f32) + b6,
        0.0)
    recon = jax.nn.sigmoid(
        jnp.dot(d.astype(bf16), s128_ref[:, 128:128 + D],
                preferred_element_type=f32) + b7)

    # ---- single coalesced output slab, static lane-slice stores ----
    out_ref[:, 0:D] = recon
    out_ref[:, D:D + L4] = mulv
    out_ref[:, D + L4:D + L4 + 1] = sig_u


# ----------------------------------------------------------------------------
# Parameter initialization (deterministic, mimics nn.Linear uniform init).
# Weights are stored [in, out]; biases as [1, out].
# ----------------------------------------------------------------------------
def _init_linear(key, d_in, d_out):
    kw, kb = jax.random.split(key)
    bound = 1.0 / jnp.sqrt(jnp.float32(d_in))
    w = jax.random.uniform(kw, (d_in, d_out), jnp.float32, -bound, bound)
    b = jax.random.uniform(kb, (1, d_out), jnp.float32, -bound, bound)
    return w, b


def init_params(key, input_dim, latent_dim):
    dims = {
        "fc1": (input_dim, 128),
        "fc2": (128, 64),
        "fc3_mu1": (64, latent_dim),
        "fc3_logvar1": (64, latent_dim),
        "fc4_mu2": (64, latent_dim),
        "fc4_logvar2": (64, latent_dim),
        "attn0": (latent_dim * 2, 64),
        "attn1": (64, latent_dim * 2),
        "aux0": (latent_dim * 2, 32),
        "aux1": (32, 1),
        "fc5": (latent_dim * 2, 64),
        "fc6": (64, 128),
        "fc7": (128, input_dim),
    }
    names = list(dims)
    keys = jax.random.split(key, len(names))
    return {n: _init_linear(k, *dims[n]) for n, k in zip(names, keys)}


# ----------------------------------------------------------------------------
# One-time weight packing (hoisted out of the per-call forward).  Weights go
# into bf16 slabs grouped by row count, each placed at a 128-aligned column
# offset so all in-kernel slices are static and lane-aligned.  Biases (and the
# aux1 weight row) stay f32 in a single [1, 10*128] vector slab.
# ----------------------------------------------------------------------------
def pack_params(params, input_dim, latent_dim):
    assert input_dim <= 128, "packing layout assumes input_dim <= 128"
    assert 1 <= latent_dim <= 32, "packing layout assumes latent_dim <= 32"
    f32, bf16 = jnp.float32, jnp.bfloat16

    def pad_cols(a, width, dtype=f32):
        a = jnp.asarray(a, f32)
        assert a.shape[1] <= width
        return jnp.pad(a, ((0, 0), (0, width - a.shape[1]))).astype(dtype)

    w1 = params["fc1"][0].astype(bf16)                                   # [D, 128]

    s128 = jnp.concatenate(
        [pad_cols(params["fc2"][0], 128, bf16),
         pad_cols(params["fc7"][0], 128, bf16)], axis=1)                 # [128, 256]

    wmulv = jnp.concatenate(
        [params["fc3_mu1"][0], params["fc4_mu2"][0],
         params["fc3_logvar1"][0], params["fc4_logvar2"][0]], axis=1)    # [64, 4L]
    s64 = jnp.concatenate(
        [pad_cols(wmulv, 128, bf16),
         pad_cols(params["attn1"][0], 128, bf16),
         params["fc6"][0].astype(bf16)], axis=1)                         # [64, 384]

    w_aux_fc5 = jnp.concatenate(
        [params["aux0"][0], params["fc5"][0]], axis=1)                   # [2L, 96]
    s2l = jnp.concatenate(
        [pad_cols(params["attn0"][0], 128, bf16),
         pad_cols(w_aux_fc5, 128, bf16)], axis=1)                        # [2L, 256]

    bmulv = jnp.concatenate(
        [params["fc3_mu1"][1], params["fc4_mu2"][1],
         params["fc3_logvar1"][1], params["fc4_logvar2"][1]], axis=1)    # [1, 4L]
    b_aux_fc5 = jnp.concatenate(
        [params["aux0"][1], params["fc5"][1]], axis=1)                   # [1, 96]
    wx1_row = params["aux1"][0].T                                        # [1, 32]

    segs = [params["fc1"][1], params["fc2"][1], bmulv,
            params["attn0"][1], params["attn1"][1],
            b_aux_fc5, params["aux1"][1],
            params["fc6"][1], params["fc7"][1],
            wx1_row]
    vec = jnp.concatenate([pad_cols(s, 128) for s in segs], axis=1)      # [1, 1280]

    return {"w1": w1, "s128": s128, "s64": s64, "s2l": s2l, "vec": vec}


# ----------------------------------------------------------------------------
# Forward wrapper: batch-tiled pallas_call with VMEM-resident weights.
# eps must be the pre-concatenated noise [B, 2*latent_dim] = [eps1 | eps2].
# ----------------------------------------------------------------------------
@functools.partial(jax.jit, static_argnames=("tb",))
def hierarchical_ic_vae_forward(packed, x, eps, *, tb=2048):
    f32 = jnp.float32
    B, D = x.shape
    L2 = eps.shape[1]
    L = L2 // 2
    L4 = 2 * L2
    out_w = D + L4 + 1

    x = x.astype(f32)
    eps = eps.astype(f32)

    # Batch tile: multiple of 8, capped so the grid has >= 2 steps whenever B
    # allows it (v7x megacore sharding + DMA/compute pipeline overlap).
    tb_eff = max(8, min(tb, _round_up(pl.cdiv(B, 2), 8)))
    grid = (pl.cdiv(B, tb_eff),)

    def row_spec(width):          # batch-tiled, pipelined
        return pl.BlockSpec((tb_eff, width), lambda i: (i, 0))

    def const_spec(shape):        # full array, constant index -> VMEM-resident
        return pl.BlockSpec(shape, lambda i: (0, 0))

    w1, s128, s64 = packed["w1"], packed["s128"], packed["s64"]
    s2l, vec = packed["s2l"], packed["vec"]

    # VMEM budget: double-buffered in/out batch tiles + resident bf16 weight
    # slabs + rough f32 activation footprint, clamped to [32, 48] MiB
    # (explicit on v5e's 16 MiB default, safely under v7x's 64 MiB physical).
    weight_bytes = 2 * (w1.size + s128.size + s64.size + s2l.size) + 4 * vec.size
    io_bytes = 4 * tb_eff * (D + L2 + out_w)
    act_bytes = 4 * tb_eff * (128 + 64 + L4 + 4 * L2 + 96 + 64 + 128 + D)
    vmem_limit = int(min(48 << 20,
                         max(32 << 20,
                             2 * (io_bytes + weight_bytes) + act_bytes + (4 << 20))))

    flops = 2 * B * (D * 128 + 128 * 64 + 64 * L4 + L2 * 64 + 64 * L2
                     + L2 * 96 + 32 + 64 * 128 + 128 * D)
    transcendentals = B * (L2 + L2 + 1 + D)
    bytes_accessed = int(4 * (x.size + eps.size + B * out_w) + weight_bytes)

    out = pl.pallas_call(
        _hic_vae_kernel,
        grid=grid,
        out_shape=jax.ShapeDtypeStruct((B, out_w), f32),
        in_specs=[
            row_spec(D), row_spec(L2),
            const_spec(w1.shape), const_spec(s128.shape),
            const_spec(s64.shape), const_spec(s2l.shape), const_spec(vec.shape),
        ],
        out_specs=row_spec(out_w),
        compiler_params=pltpu.CompilerParams(
            dimension_semantics=("parallel",),
            vmem_limit_bytes=vmem_limit,
        ),
        cost_estimate=pl.CostEstimate(
            flops=flops,
            transcendentals=transcendentals,
            bytes_accessed=bytes_accessed,
        ),
    )(x, eps, w1, s128, s64, s2l, vec)

    recon = out[:, 0:D]
    mu1 = out[:, D:D + L]
    mu2 = out[:, D + L:D + L2]
    logvar1 = out[:, D + L2:D + L2 + L]
    logvar2 = out[:, D + L2 + L:D + L4]
    kl_weight = jnp.mean(out[:, D + L4])   # mean over the true B rows only
    return recon, mu1, logvar1, mu2, logvar2, kl_weight


# ----------------------------------------------------------------------------
# Pure-JAX f32 reference (sanity check of the kernel math).
# ----------------------------------------------------------------------------
def _reference_forward(params, x, eps1, eps2):
    def lin(name, v):
        w, b = params[name]
        return v @ w + b

    h = jax.nn.relu(lin("fc1", x))
    h = jax.nn.relu(lin("fc2", h))
    mu1, lv1 = lin("fc3_mu1", h), lin("fc3_logvar1", h)
    mu2, lv2 = lin("fc4_mu2", h), lin("fc4_logvar2", h)
    z1 = mu1 + eps1 * jnp.exp(0.5 * lv1)
    z2 = mu2 + eps2 * jnp.exp(0.5 * lv2)
    z = jnp.concatenate([z1, z2], axis=1)
    gate = jax.nn.sigmoid(lin("attn1", jax.nn.relu(lin("attn0", z))))
    zg = z * gate
    klw = jnp.mean(jax.nn.sigmoid(lin("aux1", jax.nn.relu(lin("aux0", zg)))))
    d = jax.nn.relu(lin("fc5", zg))
    d = jax.nn.relu(lin("fc6", d))
    recon = jax.nn.sigmoid(lin("fc7", d))
    return recon, mu1, lv1, mu2, lv2, klw


if __name__ == "__main__":
    input_dim = 16
    latent_dim = 2          # matches the dashboard's default slider value

    root = jax.random.PRNGKey(0)
    k_params, k_x, k_e = jax.random.split(root, 3)

    params = init_params(k_params, input_dim, latent_dim)
    packed = pack_params(params, input_dim, latent_dim)   # one-time packing

    # bf16 MXU operands -> compare against the f32 reference at loose tolerance
    ATOL = RTOL = 2e-2

    # small demo batch (single grid step, partial tile)
    batch = 2
    x = jax.random.uniform(k_x, (batch, input_dim), jnp.float32)
    eps = jax.random.normal(k_e, (batch, 2 * latent_dim), jnp.float32)
    outs = jax.block_until_ready(hierarchical_ic_vae_forward(packed, x, eps))
    ref = _reference_forward(params, x, eps[:, :latent_dim], eps[:, latent_dim:])
    for a, b in zip(outs, ref):
        assert jnp.allclose(a, b, atol=ATOL, rtol=RTOL), (a, b)

    # exercise the batch grid: multiple tiles + a partial last tile
    batch2 = 300
    kx2, ke2 = jax.random.split(jax.random.PRNGKey(1), 2)
    x2 = jax.random.uniform(kx2, (batch2, input_dim), jnp.float32)
    eps2 = jax.random.normal(ke2, (batch2, 2 * latent_dim), jnp.float32)
    outs2 = jax.block_until_ready(
        hierarchical_ic_vae_forward(packed, x2, eps2, tb=128))
    ref2 = _reference_forward(params, x2, eps2[:, :latent_dim], eps2[:, latent_dim:])
    for a, b in zip(outs2, ref2):
        assert jnp.allclose(a, b, atol=ATOL, rtol=RTOL), (a, b)

    print("KERNEL_OK")
</pallas_src>

<mosaic_0001>
module attributes {stable_mosaic.version = 11 : i64} {
  func.func @_hic_vae_kernel(%arg0: i32, %arg1: memref<8x16xf32, #tpu.memory_space<vmem>>, %arg2: memref<8x4xf32, #tpu.memory_space<vmem>>, %arg3: memref<16x128xbf16, #tpu.memory_space<vmem>>, %arg4: memref<128x256xbf16, #tpu.memory_space<vmem>>, %arg5: memref<64x384xbf16, #tpu.memory_space<vmem>>, %arg6: memref<4x256xbf16, #tpu.memory_space<vmem>>, %arg7: memref<1x1280xf32, #tpu.memory_space<vmem>>, %arg8: memref<8x25xf32, #tpu.memory_space<vmem>>) attributes {dimension_semantics = [#tpu.dimension_semantics<parallel>], iteration_bounds = array<i64: 1>, scalar_prefetch = 0 : i64, scratch_operands = 0 : i64, tpu.core_type = #tpu.core_type<tc>, window_params = [{transform_indices = @transform_0, window_bounds = array<i64: 8, 16>}, {transform_indices = @transform_1, window_bounds = array<i64: 8, 4>}, {pipeline_mode = #tpu.pipeline_mode<synchronous>, transform_indices = @transform_2, window_bounds = array<i64: 16, 128>}, {pipeline_mode = #tpu.pipeline_mode<synchronous>, transform_indices = @transform_3, window_bounds = array<i64: 128, 256>}, {pipeline_mode = #tpu.pipeline_mode<synchronous>, transform_indices = @transform_4, window_bounds = array<i64: 64, 384>}, {pipeline_mode = #tpu.pipeline_mode<synchronous>, transform_indices = @transform_5, window_bounds = array<i64: 4, 256>}, {pipeline_mode = #tpu.pipeline_mode<synchronous>, transform_indices = @transform_6, window_bounds = array<i64: 1, 1280>}, {transform_indices = @transform_7, window_bounds = array<i64: 8, 25>}]} {
    %c0 = arith.constant 0 : index
    %c0_0 = arith.constant 0 : index
    %0 = vector.load %arg7[%c0, %c0_0] : memref<1x1280xf32, #tpu.memory_space<vmem>>, vector<1x128xf32>
    %c0_1 = arith.constant 0 : index
    %c128 = arith.constant 128 : index
    %1 = vector.load %arg7[%c0_1, %c128] : memref<1x1280xf32, #tpu.memory_space<vmem>>, vector<1x64xf32>
    %c0_2 = arith.constant 0 : index
    %c256 = arith.constant 256 : index
    %2 = vector.load %arg7[%c0_2, %c256] : memref<1x1280xf32, #tpu.memory_space<vmem>>, vector<1x8xf32>
    %c0_3 = arith.constant 0 : index
    %c384 = arith.constant 384 : index
    %3 = vector.load %arg7[%c0_3, %c384] : memref<1x1280xf32, #tpu.memory_space<vmem>>, vector<1x64xf32>
    %c0_4 = arith.constant 0 : index
    %c512 = arith.constant 512 : index
    %4 = vector.load %arg7[%c0_4, %c512] : memref<1x1280xf32, #tpu.memory_space<vmem>>, vector<1x4xf32>
    %c0_5 = arith.constant 0 : index
    %c640 = arith.constant 640 : index
    %5 = vector.load %arg7[%c0_5, %c640] : memref<1x1280xf32, #tpu.memory_space<vmem>>, vector<1x96xf32>
    %c0_6 = arith.constant 0 : index
    %c768 = arith.constant 768 : index
    %6 = vector.load %arg7[%c0_6, %c768] : memref<1x1280xf32, #tpu.memory_space<vmem>>, vector<1x1xf32>
    %c0_7 = arith.constant 0 : index
    %c896 = arith.constant 896 : index
    %7 = vector.load %arg7[%c0_7, %c896] : memref<1x1280xf32, #tpu.memory_space<vmem>>, vector<1x128xf32>
    %c0_8 = arith.constant 0 : index
    %c1024 = arith.constant 1024 : index
    %8 = vector.load %arg7[%c0_8, %c1024] : memref<1x1280xf32, #tpu.memory_space<vmem>>, vector<1x16xf32>
    %c0_9 = arith.constant 0 : index
    %c1152 = arith.constant 1152 : index
    %9 = vector.load %arg7[%c0_9, %c1152] : memref<1x1280xf32, #tpu.memory_space<vmem>>, vector<1x32xf32>
    %c0_10 = arith.constant 0 : index
    %c0_11 = arith.constant 0 : index
    %10 = vector.load %arg1[%c0_10, %c0_11] : memref<8x16xf32, #tpu.memory_space<vmem>>, vector<8x16xf32>
    %11 = arith.truncf %10 : vector<8x16xf32> to vector<8x16xbf16>
    %c0_12 = arith.constant 0 : index
    %c0_13 = arith.constant 0 : index
    %12 = vector.load %arg2[%c0_12, %c0_13] : memref<8x4xf32, #tpu.memory_space<vmem>>, vector<8x4xf32>
    %c0_14 = arith.constant 0 : index
    %c0_15 = arith.constant 0 : index
    %13 = vector.load %arg3[%c0_14, %c0_15] : memref<16x128xbf16, #tpu.memory_space<vmem>>, vector<16x128xbf16>
    %cst = arith.constant dense<0.000000e+00> : vector<8x128xf32>
    %14 = tpu.matmul %11, %13, %cst {dimension_numbers = #tpu.dot_dimension_numbers<[1], [0], [0], [1], [0, 0, 1, 1], [], []>} : vector<8x16xbf16>, vector<16x128xbf16>, vector<8x128xf32> -> vector<8x128xf32>
    %15 = vector.broadcast %0 : vector<1x128xf32> to vector<8x128xf32>
    %16 = arith.addf %14, %15 : vector<8x128xf32>
    %cst_16 = arith.constant 0.000000e+00 : f32
    %17 = vector.broadcast %cst_16 : f32 to vector<8x128xf32>
    %18 = arith.maximumf %16, %17 : vector<8x128xf32>
    %19 = arith.truncf %18 : vector<8x128xf32> to vector<8x128xbf16>
    %c0_17 = arith.constant 0 : index
    %c0_18 = arith.constant 0 : index
    %20 = vector.load %arg4[%c0_17, %c0_18] : memref<128x256xbf16, #tpu.memory_space<vmem>>, vector<128x64xbf16>
    %cst_19 = arith.constant dense<0.000000e+00> : vector<8x64xf32>
    %21 = tpu.matmul %19, %20, %cst_19 {dimension_numbers = #tpu.dot_dimension_numbers<[1], [0], [0], [1], [0, 0, 1, 1], [], []>} : vector<8x128xbf16>, vector<128x64xbf16>, vector<8x64xf32> -> vector<8x64xf32>
    %22 = vector.broadcast %1 : vector<1x64xf32> to vector<8x64xf32>
    %23 = arith.addf %21, %22 : vector<8x64xf32>
    %cst_20 = arith.constant 0.000000e+00 : f32
    %24 = vector.broadcast %cst_20 : f32 to vector<8x64xf32>
    %25 = arith.maximumf %23, %24 : vector<8x64xf32>
    %26 = arith.truncf %25 : vector<8x64xf32> to vector<8x64xbf16>
    %c0_21 = arith.constant 0 : index
    %c0_22 = arith.constant 0 : index
    %27 = vector.load %arg5[%c0_21, %c0_22] : memref<64x384xbf16, #tpu.memory_space<vmem>>, vector<64x8xbf16>
    %cst_23 = arith.constant dense<0.000000e+00> : vector<8x8xf32>
    %28 = tpu.matmul %26, %27, %cst_23 {dimension_numbers = #tpu.dot_dimension_numbers<[1], [0], [0], [1], [0, 0, 1, 1], [], []>} : vector<8x64xbf16>, vector<64x8xbf16>, vector<8x8xf32> -> vector<8x8xf32>
    %29 = vector.broadcast %2 : vector<1x8xf32> to vector<8x8xf32>
    %30 = arith.addf %28, %29 : vector<8x8xf32>
    %31 = vector.extract_strided_slice %30 {offsets = [0, 0], sizes = [8, 4], strides = [1, 1]} : vector<8x8xf32> to vector<8x4xf32>
    %32 = vector.extract_strided_slice %30 {offsets = [0, 4], sizes = [8, 4], strides = [1, 1]} : vector<8x8xf32> to vector<8x4xf32>
    %cst_24 = arith.constant 5.000000e-01 : f32
    %33 = vector.broadcast %cst_24 : f32 to vector<8x4xf32>
    %34 = arith.mulf %33, %32 : vector<8x4xf32>
    %35 = math.exp %34 : vector<8x4xf32>
    %36 = arith.mulf %12, %35 : vector<8x4xf32>
    %37 = arith.addf %31, %36 : vector<8x4xf32>
    %38 = arith.truncf %37 : vector<8x4xf32> to vector<8x4xbf16>
    %c0_25 = arith.constant 0 : index
    %c0_26 = arith.constant 0 : index
    %39 = vector.load %arg6[%c0_25, %c0_26] : memref<4x256xbf16, #tpu.memory_space<vmem>>, vector<4x64xbf16>
    %cst_27 = arith.constant dense<0.000000e+00> : vector<8x64xf32>
    %40 = tpu.matmul %38, %39, %cst_27 {dimension_numbers = #tpu.dot_dimension_numbers<[1], [0], [0], [1], [0, 0, 1, 1], [], []>} : vector<8x4xbf16>, vector<4x64xbf16>, vector<8x64xf32> -> vector<8x64xf32>
    %41 = vector.broadcast %3 : vector<1x64xf32> to vector<8x64xf32>
    %42 = arith.addf %40, %41 : vector<8x64xf32>
    %cst_28 = arith.constant 0.000000e+00 : f32
    %43 = vector.broadcast %cst_28 : f32 to vector<8x64xf32>
    %44 = arith.maximumf %42, %43 : vector<8x64xf32>
    %45 = arith.truncf %44 : vector<8x64xf32> to vector<8x64xbf16>
    %c0_29 = arith.constant 0 : index
    %c128_30 = arith.constant 128 : index
    %46 = vector.load %arg5[%c0_29, %c128_30] : memref<64x384xbf16, #tpu.memory_space<vmem>>, vector<64x4xbf16>
    %cst_31 = arith.constant dense<0.000000e+00> : vector<8x4xf32>
    %47 = tpu.matmul %45, %46, %cst_31 {dimension_numbers = #tpu.dot_dimension_numbers<[1], [0], [0], [1], [0, 0, 1, 1], [], []>} : vector<8x64xbf16>, vector<64x4xbf16>, vector<8x4xf32> -> vector<8x4xf32>
    %48 = vector.broadcast %4 : vector<1x4xf32> to vector<8x4xf32>
    %49 = arith.addf %47, %48 : vector<8x4xf32>
    %50 = arith.negf %49 : vector<8x4xf32>
    %51 = math.exp %50 : vector<8x4xf32>
    %cst_32 = arith.constant 1.000000e+00 : f32
    %52 = vector.broadcast %cst_32 : f32 to vector<8x4xf32>
    %53 = arith.addf %52, %51 : vector<8x4xf32>
    %54 = arith.divf %52, %53 : vector<8x4xf32>
    %55 = arith.mulf %37, %54 : vector<8x4xf32>
    %56 = arith.truncf %55 : vector<8x4xf32> to vector<8x4xbf16>
    %c0_33 = arith.constant 0 : index
    %c128_34 = arith.constant 128 : index
    %57 = vector.load %arg6[%c0_33, %c128_34] : memref<4x256xbf16, #tpu.memory_space<vmem>>, vector<4x96xbf16>
    %cst_35 = arith.constant dense<0.000000e+00> : vector<8x96xf32>
    %58 = tpu.matmul %56, %57, %cst_35 {dimension_numbers = #tpu.dot_dimension_numbers<[1], [0], [0], [1], [0, 0, 1, 1], [], []>} : vector<8x4xbf16>, vector<4x96xbf16>, vector<8x96xf32> -> vector<8x96xf32>
    %59 = vector.broadcast %5 : vector<1x96xf32> to vector<8x96xf32>
    %60 = arith.addf %58, %59 : vector<8x96xf32>
    %cst_36 = arith.constant 0.000000e+00 : f32
    %61 = vector.broadcast %cst_36 : f32 to vector<8x96xf32>
    %62 = arith.maximumf %60, %61 : vector<8x96xf32>
    %63 = vector.extract_strided_slice %62 {offsets = [0, 0], sizes = [8, 32], strides = [1, 1]} : vector<8x96xf32> to vector<8x32xf32>
    %64 = vector.extract_strided_slice %62 {offsets = [0, 32], sizes = [8, 64], strides = [1, 1]} : vector<8x96xf32> to vector<8x64xf32>
    %65 = vector.broadcast %9 : vector<1x32xf32> to vector<8x32xf32>
    %66 = arith.mulf %63, %65 : vector<8x32xf32>
    %cst_37 = arith.constant dense<0.000000e+00> : vector<8xf32>
    %67 = vector.multi_reduction <add>, %66, %cst_37 [1] : vector<8x32xf32> to vector<8xf32>
    %68 = vector.shape_cast %67 : vector<8xf32> to vector<8x1xf32>
    %69 = vector.broadcast %6 : vector<1x1xf32> to vector<8x1xf32>
    %70 = arith.addf %68, %69 : vector<8x1xf32>
    %71 = arith.negf %70 : vector<8x1xf32>
    %72 = math.exp %71 : vector<8x1xf32>
    %cst_38 = arith.constant 1.000000e+00 : f32
    %73 = vector.broadcast %cst_38 : f32 to vector<8x1xf32>
    %74 = arith.addf %73, %72 : vector<8x1xf32>
    %75 = arith.divf %73, %74 : vector<8x1xf32>
    %76 = arith.truncf %64 : vector<8x64xf32> to vector<8x64xbf16>
    %c0_39 = arith.constant 0 : index
    %c256_40 = arith.constant 256 : index
    %77 = vector.load %arg5[%c0_39, %c256_40] : memref<64x384xbf16, #tpu.memory_space<vmem>>, vector<64x128xbf16>
    %cst_41 = arith.constant dense<0.000000e+00> : vector<8x128xf32>
    %78 = tpu.matmul %76, %77, %cst_41 {dimension_numbers = #tpu.dot_dimension_numbers<[1], [0], [0], [1], [0, 0, 1, 1], [], []>} : vector<8x64xbf16>, vector<64x128xbf16>, vector<8x128xf32> -> vector<8x128xf32>
    %79 = vector.broadcast %7 : vector<1x128xf32> to vector<8x128xf32>
    %80 = arith.addf %78, %79 : vector<8x128xf32>
    %cst_42 = arith.constant 0.000000e+00 : f32
    %81 = vector.broadcast %cst_42 : f32 to vector<8x128xf32>
    %82 = arith.maximumf %80, %81 : vector<8x128xf32>
    %83 = arith.truncf %82 : vector<8x128xf32> to vector<8x128xbf16>
    %c0_43 = arith.constant 0 : index
    %c128_44 = arith.constant 128 : index
    %84 = vector.load %arg4[%c0_43, %c128_44] : memref<128x256xbf16, #tpu.memory_space<vmem>>, vector<128x16xbf16>
    %cst_45 = arith.constant dense<0.000000e+00> : vector<8x16xf32>
    %85 = tpu.matmul %83, %84, %cst_45 {dimension_numbers = #tpu.dot_dimension_numbers<[1], [0], [0], [1], [0, 0, 1, 1], [], []>} : vector<8x128xbf16>, vector<128x16xbf16>, vector<8x16xf32> -> vector<8x16xf32>
    %86 = vector.broadcast %8 : vector<1x16xf32> to vector<8x16xf32>
    %87 = arith.addf %85, %86 : vector<8x16xf32>
    %88 = arith.negf %87 : vector<8x16xf32>
    %89 = math.exp %88 : vector<8x16xf32>
    %cst_46 = arith.constant 1.000000e+00 : f32
    %90 = vector.broadcast %cst_46 : f32 to vector<8x16xf32>
    %91 = arith.addf %90, %89 : vector<8x16xf32>
    %92 = arith.divf %90, %91 : vector<8x16xf32>
    %c0_47 = arith.constant 0 : index
    %c0_48 = arith.constant 0 : index
    %93 = vector.load %arg8[%c0_47, %c0_48] : memref<8x25xf32, #tpu.memory_space<vmem>>, vector<8x16xf32>
    tpu.vector_store %arg8[%c0_47, %c0_48], %92 {strides = array<i32>} : memref<8x25xf32, #tpu.memory_space<vmem>>, vector<8x16xf32>,
    %c0_49 = arith.constant 0 : index
    %c16 = arith.constant 16 : index
    %94 = vector.load %arg8[%c0_49, %c16] : memref<8x25xf32, #tpu.memory_space<vmem>>, vector<8x8xf32>
    tpu.vector_store %arg8[%c0_49, %c16], %30 {strides = array<i32>} : memref<8x25xf32, #tpu.memory_space<vmem>>, vector<8x8xf32>,
    %c0_50 = arith.constant 0 : index
    %c24 = arith.constant 24 : index
    %95 = vector.load %arg8[%c0_50, %c24] : memref<8x25xf32, #tpu.memory_space<vmem>>, vector<8x1xf32>
    tpu.vector_store %arg8[%c0_50, %c24], %75 {strides = array<i32>} : memref<8x25xf32, #tpu.memory_space<vmem>>, vector<8x1xf32>,
    return
  }
  func.func @transform_0(%arg0: i32) -> (i32, i32) {
    %c0_i32 = arith.constant 0 : i32
    %c0_i32_0 = arith.constant 0 : i32
    return %arg0, %c0_i32 : i32, i32
  }
  func.func @transform_1(%arg0: i32) -> (i32, i32) {
    %c0_i32 = arith.constant 0 : i32
    %c0_i32_0 = arith.constant 0 : i32
    return %arg0, %c0_i32 : i32, i32
  }
  func.func @transform_2(%arg0: i32) -> (i32, i32) {
    %c0_i32 = arith.constant 0 : i32
    %c0_i32_0 = arith.constant 0 : i32
    %c0_i32_1 = arith.constant 0 : i32
    return %c0_i32, %c0_i32_0 : i32, i32
  }
  func.func @transform_3(%arg0: i32) -> (i32, i32) {
    %c0_i32 = arith.constant 0 : i32
    %c0_i32_0 = arith.constant 0 : i32
    %c0_i32_1 = arith.constant 0 : i32
    return %c0_i32, %c0_i32_0 : i32, i32
  }
  func.func @transform_4(%arg0: i32) -> (i32, i32) {
    %c0_i32 = arith.constant 0 : i32
    %c0_i32_0 = arith.constant 0 : i32
    %c0_i32_1 = arith.constant 0 : i32
    return %c0_i32, %c0_i32_0 : i32, i32
  }
  func.func @transform_5(%arg0: i32) -> (i32, i32) {
    %c0_i32 = arith.constant 0 : i32
    %c0_i32_0 = arith.constant 0 : i32
    %c0_i32_1 = arith.constant 0 : i32
    return %c0_i32, %c0_i32_0 : i32, i32
  }
  func.func @transform_6(%arg0: i32) -> (i32, i32) {
    %c0_i32 = arith.constant 0 : i32
    %c0_i32_0 = arith.constant 0 : i32
    %c0_i32_1 = arith.constant 0 : i32
    return %c0_i32, %c0_i32_0 : i32, i32
  }
  func.func @transform_7(%arg0: i32) -> (i32, i32) {
    %c0_i32 = arith.constant 0 : i32
    %c0_i32_0 = arith.constant 0 : i32
    return %arg0, %c0_i32 : i32, i32
  }
}

</mosaic_0001>

<llo_original>
// kernel: hierarchical_ic_vae_forward.1
$region0: #{hierarchical_ic_vae_forward.1}
  #allocation0 [shape = 'u32[]', space=smem, size = 0x4, offset = 0x4, fixed_abs, tag = 'smem constant byte address 0x4 - core index']
  #allocation1 [shape = 'u32[144,128]{1,0:T(1,128)}', space=vmem, size = 0x12000, scoped, tag = 'internal scratch']
  %s0 = inlined_call_operand.vmem [shape: f32[2,16], index: 0, kind: input, shape index: {}]
  %s1 = inlined_call_operand.vmem [shape: f32[2,4], index: 1, kind: input, shape index: {}]
  %s2 = inlined_call_operand.hbm [shape: bf16[16,128], index: 2, kind: input, shape index: {}]
  %s3 = inlined_call_operand.hbm [shape: bf16[128,256], index: 3, kind: input, shape index: {}]
  %s4 = inlined_call_operand.hbm [shape: bf16[64,384], index: 4, kind: input, shape index: {}]
  %s5 = inlined_call_operand.hbm [shape: bf16[4,256], index: 5, kind: input, shape index: {}]
  %s6 = inlined_call_operand.vmem [shape: f32[1,1280], index: 6, kind: input, shape index: {}]
  %s7 = inlined_call_operand.vmem [shape: f32[2,25], index: 7, kind: output, shape index: {}]
  %s8 = sld [smem:[#allocation0]]
  $region84: #{hierarchical_ic_vae_forward.1} parent=0
    _
  %s10 = ssub.s32 1, %s8
  %s11 = scalar_select 0, %s10, %s8
  $region1: #{hierarchical_ic_vae_forward.1} parent=0
    #allocation2 [shape = 'u8[4096]{0}', space=vmem, size = 0x1000, scoped, tag = 'input window, operand 2, single buffered']
    #allocation3 [shape = 's32[1]{0}', space=sflag, size = 0x4, scoped, tag = 'scoped memory for hierarchical_ic_vae_forward.1']
    #allocation4 [shape = 'u8[65536]{0}', space=vmem, size = 0x10000, scoped, tag = 'input window, operand 3, single buffered']
    #allocation5 [shape = 's32[1]{0}', space=sflag, size = 0x4, scoped, tag = 'scoped memory for hierarchical_ic_vae_forward.1']
    #allocation6 [shape = 'u8[49152]{0}', space=vmem, size = 0xc000, scoped, tag = 'input window, operand 4, single buffered']
    #allocation7 [shape = 'u8[2048]{0}', space=vmem, size = 0x800, scoped, tag = 'input window, operand 5, single buffered']
    #allocation8 [shape = 's32[1]{0}', space=sflag, size = 0x4, scoped, tag = 'scoped memory for hierarchical_ic_vae_forward.1']
    #allocation9 [shape = 'u8[4096]{0}', space=vmem, size = 0x1000, scoped, tag = 'output window, operand 0, single buffered']
    %12 = vsyncpa [#allocation3], 0
    %13 = vsyncpa [#allocation5], 0
    %14 = vsyncpa [#allocation8], 0
    // Predicated region
    $region2: #{hierarchical_ic_vae_forward.1} parent=1 // pred_check
      _
    $region3: #{hierarchical_ic_vae_forward.1} parent=1 // pred_check_branch
      %16 = sbr.rel (0) target = $region5
    $region4: #{hierarchical_ic_vae_forward.1} parent=1 // pred_region
      _
    $region5: #{hierarchical_ic_vae_forward.1} parent=1 // pred_fallthru
      _
    // Predicated region
    $region6: #{hierarchical_ic_vae_forward.1} parent=1 // pred_check
      _
    $region7: #{hierarchical_ic_vae_forward.1} parent=1 // pred_check_branch
      %18 = sbr.rel (0) target = $region9
    $region8: #{hierarchical_ic_vae_forward.1} parent=1 // pred_region
      _
    $region9: #{hierarchical_ic_vae_forward.1} parent=1 // pred_fallthru
      _
    // Predicated region
    $region10: #{hierarchical_ic_vae_forward.1} parent=1 // pred_check
      _
    $region11: #{hierarchical_ic_vae_forward.1} parent=1 // pred_check_branch
      %20 = sbr.rel (0) target = $region13
    $region12: #{hierarchical_ic_vae_forward.1} parent=1 // pred_region
      %s22 = ssub.s32 128, 128
      %23 = vsyncadd [#allocation3], %s22
      %s24 = sshll.u32 [#allocation2], 4
      %s25 = int_to_ptr.vmem [resolvable:$true] %s24
      %30 = dma.hbm_to_vmem [thread:$0]  %s2, 128, %s25, [#allocation3], 64, 64, 4
    $region13: #{hierarchical_ic_vae_forward.1} parent=1 // pred_fallthru
      _
    // Predicated region
    $region14: #{hierarchical_ic_vae_forward.1} parent=1 // pred_check
      _
    $region15: #{hierarchical_ic_vae_forward.1} parent=1 // pred_check_branch
      %32 = sbr.rel (0) target = $region17
    $region16: #{hierarchical_ic_vae_forward.1} parent=1 // pred_region
      %s34 = ssub.s32 2048, 2048
      %35 = vsyncadd [#allocation5], %s34
      %s36 = sshll.u32 [#allocation4], 4
      %s37 = int_to_ptr.vmem [resolvable:$true] %s36
      %42 = dma.hbm_to_vmem [thread:$0]  %s3, 2048, %s37, [#allocation5], 128, 128, 8
    $region17: #{hierarchical_ic_vae_forward.1} parent=1 // pred_fallthru
      _
    // Predicated region
    $region18: #{hierarchical_ic_vae_forward.1} parent=1 // pred_check
      _
    $region19: #{hierarchical_ic_vae_forward.1} parent=1 // pred_check_branch
      %44 = sbr.rel (0) target = $region21
    $region20: #{hierarchical_ic_vae_forward.1} parent=1 // pred_region
      %s46 = ssub.s32 1536, 1536
      %47 = vsyncadd [#allocation5], %s46
      %s48 = sshll.u32 [#allocation6], 4
      %s49 = int_to_ptr.vmem [resolvable:$true] %s48
      %54 = dma.hbm_to_vmem [thread:$0]  %s4, 1536, %s49, [#allocation5], 192, 192, 12
    $region21: #{hierarchical_ic_vae_forward.1} parent=1 // pred_fallthru
      _
    // Predicated region
    $region22: #{hierarchical_ic_vae_forward.1} parent=1 // pred_check
      _
    $region23: #{hierarchical_ic_vae_forward.1} parent=1 // pred_check_branch
      %56 = sbr.rel (0) target = $region25
    $region24: #{hierarchical_ic_vae_forward.1} parent=1 // pred_region
      %s58 = ssub.s32 64, 64
      %59 = vsyncadd [#allocation8], %s58
      %s61 = sshll.u32 [#allocation7], 4
      %s62 = int_to_ptr.vmem [resolvable:$true] %s61
      %64 = dma.hbm_to_vmem [thread:$0]  %s5, 64, %s62, [#allocation8]
    $region25: #{hierarchical_ic_vae_forward.1} parent=1 // pred_fallthru
      _
    // Predicated region
    $region26: #{hierarchical_ic_vae_forward.1} parent=1 // pred_check
      _
    $region27: #{hierarchical_ic_vae_forward.1} parent=1 // pred_check_branch
      %66 = sbr.rel (0) target = $region29
    $region28: #{hierarchical_ic_vae_forward.1} parent=1 // pred_region
      _
    $region29: #{hierarchical_ic_vae_forward.1} parent=1 // pred_fallthru
      _
    // Predicated region
    $region30: #{hierarchical_ic_vae_forward.1} parent=1 // pred_check
      _
    $region31: #{hierarchical_ic_vae_forward.1} parent=1 // pred_check_branch
      %68 = sbr.rel (0) target = $region33
    $region32: #{hierarchical_ic_vae_forward.1} parent=1 // pred_region
      %69 = dma.done [#allocation3], 128
    $region33: #{hierarchical_ic_vae_forward.1} parent=1 // pred_fallthru
      _
    // Predicated region
    $region34: #{hierarchical_ic_vae_forward.1} parent=1 // pred_check
      _
    $region35: #{hierarchical_ic_vae_forward.1} parent=1 // pred_check_branch
      %71 = sbr.rel (0) target = $region37
    $region36: #{hierarchical_ic_vae_forward.1} parent=1 // pred_region
      %72 = dma.done [#allocation5], 2048
    $region37: #{hierarchical_ic_vae_forward.1} parent=1 // pred_fallthru
      _
    // Predicated region
    $region38: #{hierarchical_ic_vae_forward.1} parent=1 // pred_check
      _
    $region39: #{hierarchical_ic_vae_forward.1} parent=1 // pred_check_branch
      %74 = sbr.rel (0) target = $region41
    $region40: #{hierarchical_ic_vae_forward.1} parent=1 // pred_region
      %75 = dma.done [#allocation5], 1536
    $region41: #{hierarchical_ic_vae_forward.1} parent=1 // pred_fallthru
      _
    // Predicated region
    $region42: #{hierarchical_ic_vae_forward.1} parent=1 // pred_check
      _
    $region43: #{hierarchical_ic_vae_forward.1} parent=1 // pred_check_branch
      %77 = sbr.rel (0) target = $region45
    $region44: #{hierarchical_ic_vae_forward.1} parent=1 // pred_region
      %78 = dma.done [#allocation8], 64
    $region45: #{hierarchical_ic_vae_forward.1} parent=1 // pred_fallthru
      _
    %v80 = vld [vmem:[%s6] sm:$0x1]
    %v81 = vld [vmem:[%s6 + $0x1] sm:$0x1]
    %v82 = vld [vmem:[%s6 + $0x2] sm:$0x1]
    %v83 = vld [vmem:[%s6 + $0x3] sm:$0x1]
    %v84 = vld [vmem:[%s6 + $0x4] sm:$0x1]
    %v85 = vld [vmem:[%s6 + $0x5] sm:$0x1]
    %v86 = vld [vmem:[%s6 + $0x6] sm:$0x1]
    %v87 = vld [vmem:[%s6 + $0x7] sm:$0x1]
    %v88 = vld [vmem:[%s6 + $0x8] sm:$0x1]
    %v89 = vld [vmem:[%s6 + $0x9] sm:$0x1]
    %v90 = vld [vmem:[%s0] sm:$0xff]
    %v91 = vpack.c.bf16 %v90, %v90
    %v92 = vld [vmem:[%s1] sm:$0xff]
    %v93 = vld [vmem:[#allocation2] sm:$0xf]
    %v94 = vld [vmem:[#allocation2 + $0x4] sm:$0xf]
    %v96 = vlaneseq
    %v97 = vshrl.u32 %v96, 7
    %v98 = vsub.s32 0, %v97
    %v99 = vrot.slane %v80, %v98
    %v103 = vunpack.c.l.b16 %v93
    %v104 = vunpack.c.l.b16 %v94
    %v105 = vpack.c.b16 %v104, %v103
    %vm107 = vcmask 130048
    %v109 = vsel %vm107, %v91, 0
    %111 = vmatprep.subr.bf16.mxu0 0
    %112 = vmatpush1.bf16.msra.mxu0 %v105
    %113 = vmatprep.subr.bf16.mxu0 0
    %114 = vmatpush1.bf16.msra.mxu0 0
    %115 = vmatprep.subr.bf16.mxu0 0
    %116 = vmatpush1.bf16.msra.mxu0 0
    %117 = vmatprep.subr.bf16.mxu0 0
    %118 = vmatpush1.bf16.msra.mxu0 0
    %119 = vmatprep.subr.bf16.mxu0 0
    %120 = vmatpush1.bf16.msra.mxu0 0
    %121 = vmatprep.subr.bf16.mxu0 0
    %122 = vmatpush1.bf16.msra.mxu0 0
    %123 = vmatprep.subr.bf16.mxu0 0
    %124 = vmatpush1.bf16.msra.mxu0 0
    %125 = vmatprep.subr.bf16.mxu0 0
    %126 = vmatpush1.bf16.msra.mxu0 0
    %127 = vmatprep.subr.bf16.mxu0 0
    %128 = vmatpush1.bf16.msra.mxu0 0
    %129 = vmatprep.subr.bf16.mxu0 0
    %130 = vmatpush1.bf16.msra.mxu0 0
    %131 = vmatprep.subr.bf16.mxu0 0
    %132 = vmatpush1.bf16.msra.mxu0 0
    %133 = vmatprep.subr.bf16.mxu0 0
    %134 = vmatpush1.bf16.msra.mxu0 0
    %135 = vmatprep.subr.bf16.mxu0 0
    %136 = vmatpush1.bf16.msra.mxu0 0
    %137 = vmatprep.subr.bf16.mxu0 0
    %138 = vmatpush1.bf16.msra.mxu0 0
    %139 = vmatprep.subr.bf16.mxu0 0
    %140 = vmatpush1.bf16.msra.mxu0 0
    %141 = vmatprep.subr.bf16.mxu0 0
    %142 = vmatpush1.bf16.msra.mxu0 0
    %143 = vmatprep.mubr.bf16.mxu0 0
    %144 = vmatmul.mubr.bf16.gmra.mrb[0].mxu0 %v109
    %v145 = vpop.f32.mrb[0].mxu0
    %v146 = vadd.f32 %v99, %v145
    %v147 = vpop.f32.mrb[0].mxu0
    %v148 = vpop.f32.mrb[0].mxu0
    %v149 = vpop.f32.mrb[0].mxu0
    %150 = vdwg.mxu0
    %v151 = vmax.f32 %v146, 0.0
    %v152 = vpack.c.bf16 %v151, %v151
    %v153 = vld [vmem:[#allocation4] sm:$0xf]
    %v154 = vld [vmem:[#allocation4 + $0x8] sm:$0xf]
    %v155 = vld [vmem:[#allocation4 + $0x10] sm:$0xf]
    %v156 = vld [vmem:[#allocation4 + $0x18] sm:$0xf]
    %v157 = vld [vmem:[#allocation4 + $0x20] sm:$0xf]
    %v158 = vld [vmem:[#allocation4 + $0x28] sm:$0xf]
    %v159 = vld [vmem:[#allocation4 + $0x30] sm:$0xf]
    %v160 = vld [vmem:[#allocation4 + $0x38] sm:$0xf]
    %v161 = vld [vmem:[#allocation4 + $0x40] sm:$0xf]
    %v162 = vld [vmem:[#allocation4 + $0x48] sm:$0xf]
    %v163 = vld [vmem:[#allocation4 + $0x50] sm:$0xf]
    %v164 = vld [vmem:[#allocation4 + $0x58] sm:$0xf]
    %v165 = vld [vmem:[#allocation4 + $0x60] sm:$0xf]
    %v166 = vld [vmem:[#allocation4 + $0x68] sm:$0xf]
    %v167 = vld [vmem:[#allocation4 + $0x70] sm:$0xf]
    %v168 = vld [vmem:[#allocation4 + $0x78] sm:$0xf]
    %v170 = vlaneseq
    %v171 = vshrl.u32 %v170, 7
    %v172 = vsub.s32 0, %v171
    %v173 = vrot.slane %v81, %v172
    %v191 = vunpack.c.l.b16 %v153
    %v192 = vunpack.c.l.b16 %v154
    %v193 = vunpack.c.l.b16 %v155
    %v194 = vunpack.c.l.b16 %v156
    %v195 = vunpack.c.l.b16 %v157
    %v196 = vunpack.c.l.b16 %v158
    %v197 = vunpack.c.l.b16 %v159
    %v198 = vunpack.c.l.b16 %v160
    %v199 = vunpack.c.l.b16 %v161
    %v200 = vunpack.c.l.b16 %v162
    %v201 = vunpack.c.l.b16 %v163
    %v202 = vunpack.c.l.b16 %v164
    %v203 = vunpack.c.l.b16 %v165
    %v204 = vunpack.c.l.b16 %v166
    %v205 = vunpack.c.l.b16 %v167
    %v206 = vunpack.c.l.b16 %v168
    %v207 = vpack.c.b16 %v192, %v191
    %v208 = vpack.c.b16 %v194, %v193
    %v209 = vpack.c.b16 %v196, %v195
    %v210 = vpack.c.b16 %v198, %v197
    %v211 = vpack.c.b16 %v200, %v199
    %v212 = vpack.c.b16 %v202, %v201
    %v213 = vpack.c.b16 %v204, %v203
    %v214 = vpack.c.b16 %v206, %v205
    %223 = vmatprep.subr.bf16.mxu0 0
    %224 = vmatpush1.bf16.msra.mxu0 %v207
    %225 = vmatprep.subr.bf16.mxu0 0
    %226 = vmatpush1.bf16.msra.mxu0 %v208
    %227 = vmatprep.subr.bf16.mxu0 0
    %228 = vmatpush1.bf16.msra.mxu0 %v209
    %229 = vmatprep.subr.bf16.mxu0 0
    %230 = vmatpush1.bf16.msra.mxu0 %v210
    %231 = vmatprep.subr.bf16.mxu0 0
    %232 = vmatpush1.bf16.msra.mxu0 %v211
    %233 = vmatprep.subr.bf16.mxu0 0
    %234 = vmatpush1.bf16.msra.mxu0 %v212
    %235 = vmatprep.subr.bf16.mxu0 0
    %236 = vmatpush1.bf16.msra.mxu0 %v213
    %237 = vmatprep.subr.bf16.mxu0 0
    %238 = vmatpush1.bf16.msra.mxu0 %v214
    %239 = vmatprep.subr.bf16.mxu0 0
    %240 = vmatpush1.bf16.msra.mxu0 0
    %241 = vmatprep.subr.bf16.mxu0 0
    %242 = vmatpush1.bf16.msra.mxu0 0
    %243 = vmatprep.subr.bf16.mxu0 0
    %244 = vmatpush1.bf16.msra.mxu0 0
    %245 = vmatprep.subr.bf16.mxu0 0
    %246 = vmatpush1.bf16.msra.mxu0 0
    %247 = vmatprep.subr.bf16.mxu0 0
    %248 = vmatpush1.bf16.msra.mxu0 0
    %249 = vmatprep.subr.bf16.mxu0 0
    %250 = vmatpush1.bf16.msra.mxu0 0
    %251 = vmatprep.subr.bf16.mxu0 0
    %252 = vmatpush1.bf16.msra.mxu0 0
    %253 = vmatprep.subr.bf16.mxu0 0
    %254 = vmatpush1.bf16.msra.mxu0 0
    %255 = vmatprep.mubr.bf16.mxu0 0
    %256 = vmatmul.mubr.bf16.gmra.mrb[0].mxu0 %v152
    %v257 = vpop.f32.mrb[0].mxu0
    %v258 = vadd.f32 %v173, %v257
    %v259 = vpop.f32.mrb[0].mxu0
    %v260 = vpop.f32.mrb[0].mxu0
    %v261 = vpop.f32.mrb[0].mxu0
    %262 = vdwg.mxu0
    %v263 = vmax.f32 %v258, 0.0
    %v264 = vpack.c.bf16 %v263, %v263
    %v265 = vld [vmem:[#allocation6] sm:$0xf]
    %v266 = vld [vmem:[#allocation6 + $0xc] sm:$0xf]
    %v267 = vld [vmem:[#allocation6 + $0x18] sm:$0xf]
    %v268 = vld [vmem:[#allocation6 + $0x24] sm:$0xf]
    %v269 = vld [vmem:[#allocation6 + $0x30] sm:$0xf]
    %v270 = vld [vmem:[#allocation6 + $0x3c] sm:$0xf]
    %v271 = vld [vmem:[#allocation6 + $0x48] sm:$0xf]
    %v272 = vld [vmem:[#allocation6 + $0x54] sm:$0xf]
    %v274 = vlaneseq
    %v275 = vshrl.u32 %v274, 7
    %v276 = vsub.s32 0, %v275
    %v277 = vrot.slane %v82, %v276
    %v287 = vunpack.c.l.b16 %v265
    %v288 = vunpack.c.l.b16 %v266
    %v289 = vunpack.c.l.b16 %v267
    %v290 = vunpack.c.l.b16 %v268
    %v291 = vunpack.c.l.b16 %v269
    %v292 = vunpack.c.l.b16 %v270
    %v293 = vunpack.c.l.b16 %v271
    %v294 = vunpack.c.l.b16 %v272
    %v295 = vpack.c.b16 %v288, %v287
    %v296 = vpack.c.b16 %v290, %v289
    %v297 = vpack.c.b16 %v292, %v291
    %v298 = vpack.c.b16 %v294, %v293
    %vm303 = vcmask 523264
    %v305 = vsel %vm303, %v264, 0
    %307 = vmatprep.subr.bf16.mxu0 0
    %308 = vmatpush1.bf16.msra.mxu0 %v295
    %309 = vmatprep.subr.bf16.mxu0 0
    %310 = vmatpush1.bf16.msra.mxu0 %v296
    %311 = vmatprep.subr.bf16.mxu0 0
    %312 = vmatpush1.bf16.msra.mxu0 %v297
    %313 = vmatprep.subr.bf16.mxu0 0
    %314 = vmatpush1.bf16.msra.mxu0 %v298
    %315 = vmatprep.subr.bf16.mxu0 0
    %316 = vmatpush1.bf16.msra.mxu0 0
    %317 = vmatprep.subr.bf16.mxu0 0
    %318 = vmatpush1.bf16.msra.mxu0 0
    %319 = vmatprep.subr.bf16.mxu0 0
    %320 = vmatpush1.bf16.msra.mxu0 0
    %321 = vmatprep.subr.bf16.mxu0 0
    %322 = vmatpush1.bf16.msra.mxu0 0
    %323 = vmatprep.subr.bf16.mxu0 0
    %324 = vmatpush1.bf16.msra.mxu0 0
    %325 = vmatprep.subr.bf16.mxu0 0
    %326 = vmatpush1.bf16.msra.mxu0 0
    %327 = vmatprep.subr.bf16.mxu0 0
    %328 = vmatpush1.bf16.msra.mxu0 0
    %329 = vmatprep.subr.bf16.mxu0 0
    %330 = vmatpush1.bf16.msra.mxu0 0
    %331 = vmatprep.subr.bf16.mxu0 0
    %332 = vmatpush1.bf16.msra.mxu0 0
    %333 = vmatprep.subr.bf16.mxu0 0
    %334 = vmatpush1.bf16.msra.mxu0 0
    %335 = vmatprep.subr.bf16.mxu0 0
    %336 = vmatpush1.bf16.msra.mxu0 0
    %337 = vmatprep.subr.bf16.mxu0 0
    %338 = vmatpush1.bf16.msra.mxu0 0
    %339 = vmatprep.mubr.bf16.mxu0 0
    %340 = vmatmul.mubr.bf16.gmra.mrb[0].mxu0 %v305
    %v341 = vpop.f32.mrb[0].mxu0
    %v342 = vadd.f32 %v277, %v341
    %v343 = vpop.f32.mrb[0].mxu0
    %v344 = vpop.f32.mrb[0].mxu0
    %v345 = vpop.f32.mrb[0].mxu0
    %346 = vdwg.mxu0
    %v347 = vmul.f32 %v342, 0.5
    %v348 = vmul.f32 %v347, 1.442695
    %v349 = vpow.pop %v348
    %351 = vrot.lane.b32.xlu0 %v349, 124
    %v352 = vpop.permute.xlu0 %351
    %v354 = vmul.f32 %v92, %v352
    %v355 = vadd.f32 %v342, %v354
    %v356 = vpack.c.bf16 %v355, %v355
    %v357 = vld [vmem:[#allocation7] sm:$0x3]
    %v359 = vlaneseq
    %v360 = vshrl.u32 %v359, 7
    %v361 = vsub.s32 0, %v360
    %v362 = vrot.slane %v83, %v361
    %vm364 = vcmask 31744
    %v366 = vsel %vm364, %v356, 0
    %vm368 = vcmask 1041408
    %v370 = vsel %vm368, %v357, 0
    %372 = vmatprep.subr.bf16.mxu0 0
    %373 = vmatpush1.bf16.msra.mxu0 %v370
    %374 = vmatprep.subr.bf16.mxu0 0
    %375 = vmatpush1.bf16.msra.mxu0 0
    %376 = vmatprep.subr.bf16.mxu0 0
    %377 = vmatpush1.bf16.msra.mxu0 0
    %378 = vmatprep.subr.bf16.mxu0 0
    %379 = vmatpush1.bf16.msra.mxu0 0
    %380 = vmatprep.subr.bf16.mxu0 0
    %381 = vmatpush1.bf16.msra.mxu0 0
    %382 = vmatprep.subr.bf16.mxu0 0
    %383 = vmatpush1.bf16.msra.mxu0 0
    %384 = vmatprep.subr.bf16.mxu0 0
    %385 = vmatpush1.bf16.msra.mxu0 0
    %386 = vmatprep.subr.bf16.mxu0 0
    %387 = vmatpush1.bf16.msra.mxu0 0
    %388 = vmatprep.subr.bf16.mxu0 0
    %389 = vmatpush1.bf16.msra.mxu0 0
    %390 = vmatprep.subr.bf16.mxu0 0
    %391 = vmatpush1.bf16.msra.mxu0 0
    %392 = vmatprep.subr.bf16.mxu0 0
    %393 = vmatpush1.bf16.msra.mxu0 0
    %394 = vmatprep.subr.bf16.mxu0 0
    %395 = vmatpush1.bf16.msra.mxu0 0
    %396 = vmatprep.subr.bf16.mxu0 0
    %397 = vmatpush1.bf16.msra.mxu0 0
    %398 = vmatprep.subr.bf16.mxu0 0
    %399 = vmatpush1.bf16.msra.mxu0 0
    %400 = vmatprep.subr.bf16.mxu0 0
    %401 = vmatpush1.bf16.msra.mxu0 0
    %402 = vmatprep.subr.bf16.mxu0 0
    %403 = vmatpush1.bf16.msra.mxu0 0
    %404 = vmatprep.mubr.bf16.mxu0 0
    %405 = vmatmul.mubr.bf16.gmra.mrb[0].mxu0 %v366
    %v406 = vpop.f32.mrb[0].mxu0
    %v407 = vadd.f32 %v362, %v406
    %v408 = vpop.f32.mrb[0].mxu0
    %v409 = vpop.f32.mrb[0].mxu0
    %v410 = vpop.f32.mrb[0].mxu0
    %411 = vdwg.mxu0
    %v412 = vmax.f32 %v407, 0.0
    %v413 = vpack.c.bf16 %v412, %v412
    %v414 = vld [vmem:[#allocation6 + $0x4] sm:$0xf]
    %v415 = vld [vmem:[#allocation6 + $0x10] sm:$0xf]
    %v416 = vld [vmem:[#allocation6 + $0x1c] sm:$0xf]
    %v417 = vld [vmem:[#allocation6 + $0x28] sm:$0xf]
    %v418 = vld [vmem:[#allocation6 + $0x34] sm:$0xf]
    %v419 = vld [vmem:[#allocation6 + $0x40] sm:$0xf]
    %v420 = vld [vmem:[#allocation6 + $0x4c] sm:$0xf]
    %v421 = vld [vmem:[#allocation6 + $0x58] sm:$0xf]
    %v423 = vlaneseq
    %v424 = vshrl.u32 %v423, 7
    %v425 = vsub.s32 0, %v424
    %v426 = vrot.slane %v84, %v425
    %v436 = vunpack.c.l.b16 %v414
    %v437 = vunpack.c.l.b16 %v415
    %v438 = vunpack.c.l.b16 %v416
    %v439 = vunpack.c.l.b16 %v417
    %v440 = vunpack.c.l.b16 %v418
    %v441 = vunpack.c.l.b16 %v419
    %v442 = vunpack.c.l.b16 %v420
    %v443 = vunpack.c.l.b16 %v421
    %v444 = vpack.c.b16 %v437, %v436
    %v445 = vpack.c.b16 %v439, %v438
    %v446 = vpack.c.b16 %v441, %v440
    %v447 = vpack.c.b16 %v443, %v442
    %v453 = vsel %vm303, %v413, 0
    %455 = vmatprep.subr.bf16.mxu0 0
    %456 = vmatpush1.bf16.msra.mxu0 %v444
    %457 = vmatprep.subr.bf16.mxu0 0
    %458 = vmatpush1.bf16.msra.mxu0 %v445
    %459 = vmatprep.subr.bf16.mxu0 0
    %460 = vmatpush1.bf16.msra.mxu0 %v446
    %461 = vmatprep.subr.bf16.mxu0 0
    %462 = vmatpush1.bf16.msra.mxu0 %v447
    %463 = vmatprep.subr.bf16.mxu0 0
    %464 = vmatpush1.bf16.msra.mxu0 0
    %465 = vmatprep.subr.bf16.mxu0 0
    %466 = vmatpush1.bf16.msra.mxu0 0
    %467 = vmatprep.subr.bf16.mxu0 0
    %468 = vmatpush1.bf16.msra.mxu0 0
    %469 = vmatprep.subr.bf16.mxu0 0
    %470 = vmatpush1.bf16.msra.mxu0 0
    %471 = vmatprep.subr.bf16.mxu0 0
    %472 = vmatpush1.bf16.msra.mxu0 0
    %473 = vmatprep.subr.bf16.mxu0 0
    %474 = vmatpush1.bf16.msra.mxu0 0
    %475 = vmatprep.subr.bf16.mxu0 0
    %476 = vmatpush1.bf16.msra.mxu0 0
    %477 = vmatprep.subr.bf16.mxu0 0
    %478 = vmatpush1.bf16.msra.mxu0 0
    %479 = vmatprep.subr.bf16.mxu0 0
    %480 = vmatpush1.bf16.msra.mxu0 0
    %481 = vmatprep.subr.bf16.mxu0 0
    %482 = vmatpush1.bf16.msra.mxu0 0
    %483 = vmatprep.subr.bf16.mxu0 0
    %484 = vmatpush1.bf16.msra.mxu0 0
    %485 = vmatprep.subr.bf16.mxu0 0
    %486 = vmatpush1.bf16.msra.mxu0 0
    %487 = vmatprep.mubr.bf16.mxu0 0
    %488 = vmatmul.mubr.bf16.gmra.mrb[0].mxu0 %v453
    %v489 = vpop.f32.mrb[0].mxu0
    %v490 = vadd.f32 %v426, %v489
    %v491 = vpop.f32.mrb[0].mxu0
    %v492 = vpop.f32.mrb[0].mxu0
    %v493 = vpop.f32.mrb[0].mxu0
    %494 = vdwg.mxu0
    %v495 = vxor.u32 %v490, 2147483648
    %v496 = vmul.f32 %v495, 1.442695
    %v497 = vpow.pop %v496
    %v498 = vadd.f32 %v497, 1.0
    %v499 = vrcp.pop %v498
    %v500 = vmul.f32 1.0, %v499
    %v501 = vmul.f32 %v355, %v500
    %v502 = vpack.c.bf16 %v501, %v501
    %v503 = vld [vmem:[#allocation7 + $0x2] sm:$0x3]
    %v505 = vlaneseq
    %v506 = vshrl.u32 %v505, 7
    %v507 = vsub.s32 0, %v506
    %v508 = vrot.slane %v85, %v507
    %v511 = vsel %vm364, %v502, 0
    %v514 = vsel %vm368, %v503, 0
    %516 = vmatprep.subr.bf16.mxu0 0
    %517 = vmatpush1.bf16.msra.mxu0 %v514
    %518 = vmatprep.subr.bf16.mxu0 0
    %519 = vmatpush1.bf16.msra.mxu0 0
    %520 = vmatprep.subr.bf16.mxu0 0
    %521 = vmatpush1.bf16.msra.mxu0 0
    %522 = vmatprep.subr.bf16.mxu0 0
    %523 = vmatpush1.bf16.msra.mxu0 0
    %524 = vmatprep.subr.bf16.mxu0 0
    %525 = vmatpush1.bf16.msra.mxu0 0
    %526 = vmatprep.subr.bf16.mxu0 0
    %527 = vmatpush1.bf16.msra.mxu0 0
    %528 = vmatprep.subr.bf16.mxu0 0
    %529 = vmatpush1.bf16.msra.mxu0 0
    %530 = vmatprep.subr.bf16.mxu0 0
    %531 = vmatpush1.bf16.msra.mxu0 0
    %532 = vmatprep.subr.bf16.mxu0 0
    %533 = vmatpush1.bf16.msra.mxu0 0
    %534 = vmatprep.subr.bf16.mxu0 0
    %535 = vmatpush1.bf16.msra.mxu0 0
    %536 = vmatprep.subr.bf16.mxu0 0
    %537 = vmatpush1.bf16.msra.mxu0 0
    %538 = vmatprep.subr.bf16.mxu0 0
    %539 = vmatpush1.bf16.msra.mxu0 0
    %540 = vmatprep.subr.bf16.mxu0 0
    %541 = vmatpush1.bf16.msra.mxu0 0
    %542 = vmatprep.subr.bf16.mxu0 0
    %543 = vmatpush1.bf16.msra.mxu0 0
    %544 = vmatprep.subr.bf16.mxu0 0
    %545 = vmatpush1.bf16.msra.mxu0 0
    %546 = vmatprep.subr.bf16.mxu0 0
    %547 = vmatpush1.bf16.msra.mxu0 0
    %548 = vmatprep.mubr.bf16.mxu0 0
    %549 = vmatmul.mubr.bf16.gmra.mrb[0].mxu0 %v511
    %v550 = vpop.f32.mrb[0].mxu0
    %v551 = vadd.f32 %v508, %v550
    %v552 = vpop.f32.mrb[0].mxu0
    %v553 = vpop.f32.mrb[0].mxu0
    %v554 = vpop.f32.mrb[0].mxu0
    %555 = vdwg.mxu0
    %v556 = vmax.f32 %v551, 0.0
    %v558 = vlaneseq
    %v559 = vshrl.u32 %v558, 7
    %v560 = vsub.s32 0, %v559
    %v561 = vrot.slane %v89, %v560
    %v563 = vmul.f32 %v556, %v561
    %vm564 = vcmask 261120
    %v565 = vsel %vm564, %v563, 0.0
    %566 = vadd.xlane.f32.xlu0 %v565
    %v567 = vpop.xlane.xlu0 %566
    %v569 = vlaneseq
    %v570 = vshrl.u32 %v569, 7
    %v571 = vsub.s32 0, %v570
    %v572 = vrot.slane %v86, %v571
    %v574 = vadd.f32 %v567, %v572
    %v575 = vxor.u32 %v574, 2147483648
    %v576 = vmul.f32 %v575, 1.442695
    %v577 = vpow.pop %v576
    %v578 = vadd.f32 %v577, 1.0
    %v579 = vrcp.pop %v578
    %v580 = vmul.f32 1.0, %v579
    %v581 = vpack.c.bf16 %v556, %v556
    %v582 = vld [vmem:[#allocation6 + $0x8] sm:$0xf]
    %v583 = vld [vmem:[#allocation6 + $0x14] sm:$0xf]
    %v584 = vld [vmem:[#allocation6 + $0x20] sm:$0xf]
    %v585 = vld [vmem:[#allocation6 + $0x2c] sm:$0xf]
    %v586 = vld [vmem:[#allocation6 + $0x38] sm:$0xf]
    %v587 = vld [vmem:[#allocation6 + $0x44] sm:$0xf]
    %v588 = vld [vmem:[#allocation6 + $0x50] sm:$0xf]
    %v589 = vld [vmem:[#allocation6 + $0x5c] sm:$0xf]
    %v591 = vlaneseq
    %v592 = vshrl.u32 %v591, 7
    %v593 = vsub.s32 0, %v592
    %v594 = vrot.slane %v87, %v593
    %597 = vrot.lane.b32.xlu0 %v581, 96
    %v598 = vpop.permute.xlu0 %597
    %v607 = vunpack.c.l.b16 %v582
    %v608 = vunpack.c.l.b16 %v583
    %v609 = vunpack.c.l.b16 %v584
    %v610 = vunpack.c.l.b16 %v585
    %v611 = vunpack.c.l.b16 %v586
    %v612 = vunpack.c.l.b16 %v587
    %v613 = vunpack.c.l.b16 %v588
    %v614 = vunpack.c.l.b16 %v589
    %v615 = vpack.c.b16 %v608, %v607
    %v616 = vpack.c.b16 %v610, %v609
    %v617 = vpack.c.b16 %v612, %v611
    %v618 = vpack.c.b16 %v614, %v613
    %v624 = vsel %vm303, %v598, 0
    %626 = vmatprep.subr.bf16.mxu0 0
    %627 = vmatpush1.bf16.msra.mxu0 %v615
    %628 = vmatprep.subr.bf16.mxu0 0
    %629 = vmatpush1.bf16.msra.mxu0 %v616
    %630 = vmatprep.subr.bf16.mxu0 0
    %631 = vmatpush1.bf16.msra.mxu0 %v617
    %632 = vmatprep.subr.bf16.mxu0 0
    %633 = vmatpush1.bf16.msra.mxu0 %v618
    %634 = vmatprep.subr.bf16.mxu0 0
    %635 = vmatpush1.bf16.msra.mxu0 0
    %636 = vmatprep.subr.bf16.mxu0 0
    %637 = vmatpush1.bf16.msra.mxu0 0
    %638 = vmatprep.subr.bf16.mxu0 0
    %639 = vmatpush1.bf16.msra.mxu0 0
    %640 = vmatprep.subr.bf16.mxu0 0
    %641 = vmatpush1.bf16.msra.mxu0 0
    %642 = vmatprep.subr.bf16.mxu0 0
    %643 = vmatpush1.bf16.msra.mxu0 0
    %644 = vmatprep.subr.bf16.mxu0 0
    %645 = vmatpush1.bf16.msra.mxu0 0
    %646 = vmatprep.subr.bf16.mxu0 0
    %647 = vmatpush1.bf16.msra.mxu0 0
    %648 = vmatprep.subr.bf16.mxu0 0
    %649 = vmatpush1.bf16.msra.mxu0 0
    %650 = vmatprep.subr.bf16.mxu0 0
    %651 = vmatpush1.bf16.msra.mxu0 0
    %652 = vmatprep.subr.bf16.mxu0 0
    %653 = vmatpush1.bf16.msra.mxu0 0
    %654 = vmatprep.subr.bf16.mxu0 0
    %655 = vmatpush1.bf16.msra.mxu0 0
    %656 = vmatprep.subr.bf16.mxu0 0
    %657 = vmatpush1.bf16.msra.mxu0 0
    %658 = vmatprep.mubr.bf16.mxu0 0
    %659 = vmatmul.mubr.bf16.gmra.mrb[0].mxu0 %v624
    %v660 = vpop.f32.mrb[0].mxu0
    %v661 = vadd.f32 %v594, %v660
    %v662 = vpop.f32.mrb[0].mxu0
    %v663 = vpop.f32.mrb[0].mxu0
    %v664 = vpop.f32.mrb[0].mxu0
    %665 = vdwg.mxu0
    %v666 = vmax.f32 %v661, 0.0
    %v667 = vpack.c.bf16 %v666, %v666
    %v668 = vld [vmem:[#allocation4 + $0x4] sm:$0xf]
    %v669 = vld [vmem:[#allocation4 + $0xc] sm:$0xf]
    %v670 = vld [vmem:[#allocation4 + $0x14] sm:$0xf]
    %v671 = vld [vmem:[#allocation4 + $0x1c] sm:$0xf]
    %v672 = vld [vmem:[#allocation4 + $0x24] sm:$0xf]
    %v673 = vld [vmem:[#allocation4 + $0x2c] sm:$0xf]
    %v674 = vld [vmem:[#allocation4 + $0x34] sm:$0xf]
    %v675 = vld [vmem:[#allocation4 + $0x3c] sm:$0xf]
    %v676 = vld [vmem:[#allocation4 + $0x44] sm:$0xf]
    %v677 = vld [vmem:[#allocation4 + $0x4c] sm:$0xf]
    %v678 = vld [vmem:[#allocation4 + $0x54] sm:$0xf]
    %v679 = vld [vmem:[#allocation4 + $0x5c] sm:$0xf]
    %v680 = vld [vmem:[#allocation4 + $0x64] sm:$0xf]
    %v681 = vld [vmem:[#allocation4 + $0x6c] sm:$0xf]
    %v682 = vld [vmem:[#allocation4 + $0x74] sm:$0xf]
    %v683 = vld [vmem:[#allocation4 + $0x7c] sm:$0xf]
    %v685 = vlaneseq
    %v686 = vshrl.u32 %v685, 7
    %v687 = vsub.s32 0, %v686
    %v688 = vrot.slane %v88, %v687
    %v706 = vunpack.c.l.b16 %v668
    %v707 = vunpack.c.l.b16 %v669
    %v708 = vunpack.c.l.b16 %v670
    %v709 = vunpack.c.l.b16 %v671
    %v710 = vunpack.c.l.b16 %v672
    %v711 = vunpack.c.l.b16 %v673
    %v712 = vunpack.c.l.b16 %v674
    %v713 = vunpack.c.l.b16 %v675
    %v714 = vunpack.c.l.b16 %v676
    %v715 = vunpack.c.l.b16 %v677
    %v716 = vunpack.c.l.b16 %v678
    %v717 = vunpack.c.l.b16 %v679
    %v718 = vunpack.c.l.b16 %v680
    %v719 = vunpack.c.l.b16 %v681
    %v720 = vunpack.c.l.b16 %v682
    %v721 = vunpack.c.l.b16 %v683
    %v722 = vpack.c.b16 %v707, %v706
    %v723 = vpack.c.b16 %v709, %v708
    %v724 = vpack.c.b16 %v711, %v710
    %v725 = vpack.c.b16 %v713, %v712
    %v726 = vpack.c.b16 %v715, %v714
    %v727 = vpack.c.b16 %v717, %v716
    %v728 = vpack.c.b16 %v719, %v718
    %v729 = vpack.c.b16 %v721, %v720
    %738 = vmatprep.subr.bf16.mxu0 0
    %739 = vmatpush1.bf16.msra.mxu0 %v722
    %740 = vmatprep.subr.bf16.mxu0 0
    %741 = vmatpush1.bf16.msra.mxu0 %v723
    %742 = vmatprep.subr.bf16.mxu0 0
    %743 = vmatpush1.bf16.msra.mxu0 %v724
    %744 = vmatprep.subr.bf16.mxu0 0
    %745 = vmatpush1.bf16.msra.mxu0 %v725
    %746 = vmatprep.subr.bf16.mxu0 0
    %747 = vmatpush1.bf16.msra.mxu0 %v726
    %748 = vmatprep.subr.bf16.mxu0 0
    %749 = vmatpush1.bf16.msra.mxu0 %v727
    %750 = vmatprep.subr.bf16.mxu0 0
    %751 = vmatpush1.bf16.msra.mxu0 %v728
    %752 = vmatprep.subr.bf16.mxu0 0
    %753 = vmatpush1.bf16.msra.mxu0 %v729
    %754 = vmatprep.subr.bf16.mxu0 0
    %755 = vmatpush1.bf16.msra.mxu0 0
    %756 = vmatprep.subr.bf16.mxu0 0
    %757 = vmatpush1.bf16.msra.mxu0 0
    %758 = vmatprep.subr.bf16.mxu0 0
    %759 = vmatpush1.bf16.msra.mxu0 0
    %760 = vmatprep.subr.bf16.mxu0 0
    %761 = vmatpush1.bf16.msra.mxu0 0
    %762 = vmatprep.subr.bf16.mxu0 0
    %763 = vmatpush1.bf16.msra.mxu0 0
    %764 = vmatprep.subr.bf16.mxu0 0
    %765 = vmatpush1.bf16.msra.mxu0 0
    %766 = vmatprep.subr.bf16.mxu0 0
    %767 = vmatpush1.bf16.msra.mxu0 0
    %768 = vmatprep.subr.bf16.mxu0 0
    %769 = vmatpush1.bf16.msra.mxu0 0
    %770 = vmatprep.mubr.bf16.mxu0 0
    %771 = vmatmul.mubr.bf16.gmra.mrb[0].mxu0 %v667
    %v772 = vpop.f32.mrb[0].mxu0
    %v773 = vadd.f32 %v688, %v772
    %v774 = vpop.f32.mrb[0].mxu0
    %v775 = vpop.f32.mrb[0].mxu0
    %v776 = vpop.f32.mrb[0].mxu0
    %777 = vdwg.mxu0
    %v778 = vxor.u32 %v773, 2147483648
    %v779 = vmul.f32 %v778, 1.442695
    %v780 = vpow.pop %v779
    %v781 = vadd.f32 %v780, 1.0
    %v782 = vrcp.pop %v781
    %v783 = vmul.f32 1.0, %v782
    %784 = vst.msk [vmem:[#allocation9] sm:$0xff] %vm107, %v783
    %786 = vrot.lane.b32.xlu0 %v342, 16
    %v787 = vpop.permute.xlu0 %786
    %vm789 = vcmask 195712
    %790 = vst.msk [vmem:[#allocation9] sm:$0xff] %vm789, %v787
    %792 = vrot.lane.b32.xlu0 %v580, 24
    %v793 = vpop.permute.xlu0 %792
    %vm795 = vcmask 203968
    %796 = vst.msk [vmem:[#allocation9] sm:$0xff] %vm795, %v793
    // Predicated region
    $region46: #{hierarchical_ic_vae_forward.1} parent=1 // pred_check
      _
    $region47: #{hierarchical_ic_vae_forward.1} parent=1 // pred_check_branch
      %798 = sbr.rel (0) target = $region49
    $region48: #{hierarchical_ic_vae_forward.1} parent=1 // pred_region
      // Predicated region
      $region50: #{hierarchical_ic_vae_forward.1} parent=48 // pred_check
        _
      $region51: #{hierarchical_ic_vae_forward.1} parent=48 // pred_check_branch
        %800 = sbr.rel (0) target = $region53
      $region52: #{hierarchical_ic_vae_forward.1} parent=48 // pred_region
        // Predicated region
        $region54: #{hierarchical_ic_vae_forward.1} parent=52 // pred_check
          _
        $region55: #{hierarchical_ic_vae_forward.1} parent=52 // pred_check_branch
          %802 = sbr.rel target = $region57
        $region56: #{hierarchical_ic_vae_forward.1} parent=52 // pred_region
          // Predicated region
          $region69: #{hierarchical_ic_vae_forward.1} parent=56 // pred_check
            _
          $region70: #{hierarchical_ic_vae_forward.1} parent=56 // pred_check_branch
            %817 = sbr.rel (0) target = $region72
          $region71: #{hierarchical_ic_vae_forward.1} parent=56 // pred_region
            loop: start=0, step=1, limit=1
            $region73: #{hierarchical_ic_vae_forward.1} parent=71 // loop_pre_header
              _
            $region74: #{hierarchical_ic_vae_forward.1} parent=71 // loop_header
              %s820 = sphi 0, %s824
              %p821 = scmp.ge.s32.totalorder %s820, 1
              %s825 = sphi [#allocation9], [#allocation9]
              %s826 = sphi %s7, %s7
            $region75: #{hierarchical_ic_vae_forward.1} parent=71 // loop_header_branch
              %823 = sbr.rel (%p821) target = $region79
            $region76: #{hierarchical_ic_vae_forward.1} parent=71 // loop_body
              %v827 = vld [vmem:[%s825] sm:$0x3]
              %828 = vst [vmem:[%s826] sm:$0x3] %v827
            $region77: #{hierarchical_ic_vae_forward.1} parent=71 // loop_footer
              %s824 = sadd.s32 1, %s820
            $region78: #{hierarchical_ic_vae_forward.1} parent=71 // loop_footer_branch
              %819 = sbr.rel target = $region74
            $region79: #{hierarchical_ic_vae_forward.1} parent=71 // loop_exit
              _
          $region72: #{hierarchical_ic_vae_forward.1} parent=56 // pred_fallthru
            _
        $region57: #{hierarchical_ic_vae_forward.1} parent=52 // pred_fallthru
          _
        // Predicated region
        $region58: #{hierarchical_ic_vae_forward.1} parent=52 // pred_check
          _
        $region59: #{hierarchical_ic_vae_forward.1} parent=52 // pred_check_branch
          %804 = sbr.rel (0) target = $region61
        $region60: #{hierarchical_ic_vae_forward.1} parent=52 // pred_region
          loop: start=0, step=1, limit=1
          $region62: #{hierarchical_ic_vae_forward.1} parent=60 // loop_pre_header
            _
          $region63: #{hierarchical_ic_vae_forward.1} parent=60 // loop_header
            %s807 = sphi 0, %s811
            %p808 = scmp.ge.s32.totalorder %s807, 1
            %s812 = sphi [#allocation9], [#allocation9]
            %s813 = sphi %s7, %s7
          $region64: #{hierarchical_ic_vae_forward.1} parent=60 // loop_header_branch
            %810 = sbr.rel (%p808) target = $region68
          $region65: #{hierarchical_ic_vae_forward.1} parent=60 // loop_body
            %v814 = vld [vmem:[%s812] sm:$0x3]
            %815 = vst [vmem:[%s813] sm:$0x3] %v814
          $region66: #{hierarchical_ic_vae_forward.1} parent=60 // loop_footer
            %s811 = sadd.s32 1, %s807
          $region67: #{hierarchical_ic_vae_forward.1} parent=60 // loop_footer_branch
            %806 = sbr.rel target = $region63
          $region68: #{hierarchical_ic_vae_forward.1} parent=60 // loop_exit
            _
        $region61: #{hierarchical_ic_vae_forward.1} parent=52 // pred_fallthru
          _
      $region53: #{hierarchical_ic_vae_forward.1} parent=48 // pred_fallthru
        _
      %829 = vnop
    $region49: #{hierarchical_ic_vae_forward.1} parent=1 // pred_fallthru
      _
    // Predicated region
    $region80: #{hierarchical_ic_vae_forward.1} parent=1 // pred_check
      _
    $region81: #{hierarchical_ic_vae_forward.1} parent=1 // pred_check_branch
      %831 = sbr.rel (0) target = $region83
    $region82: #{hierarchical_ic_vae_forward.1} parent=1 // pred_region
      _
    $region83: #{hierarchical_ic_vae_forward.1} parent=1 // pred_fallthru
      _
    %832 = vsyncpa [#allocation3], 1
    %833 = vsyncpa [#allocation5], 1
    %834 = vsyncpa [#allocation8], 1

</llo_original>
